<compile_context>
chip_gen: v7x
topology: tpu7x:2x2x1
jax: 0.10.0
libtpu: 0.0.40
codegen_flags: <defaults>
</compile_context>

<pallas_src>
import jax
import jax.numpy as jnp
from jax.experimental import pallas as pl
from jax.experimental.pallas import tpu as pltpu

EPS_F32 = 1e-5                              # torch LayerNorm eps for float32
_VMEM_BLOCK_BUDGET = 24 * 1024 * 1024       # activation-tile budget (v7x-safe)
_VMEM_LIMIT_BYTES = 48 * 1024 * 1024        # scoped-VMEM limit (<= 64 MiB/TC on v7x)


# ----------------------------------------------------------------------------
# Helpers
# ----------------------------------------------------------------------------
def _invariant_spec(block_shape, index_map):
    """BlockSpec for a grid-invariant operand: single-buffered (Buffered(1)),
    since its index_map never changes there is nothing to pipeline.  Falls back
    to a plain (double-buffered) spec on JAX versions without pipeline_mode."""
    try:
        return pl.BlockSpec(block_shape, index_map, pipeline_mode=pl.Buffered(1))
    except (TypeError, ValueError, AttributeError):
        return pl.BlockSpec(block_shape, index_map)


def _per_position_bytes(cin, cout, x_itemsize, out_itemsize):
    """VMEM bytes per spatial position / row across all live buffers:
    double-buffered input + double-buffered output + f32 upcast of the input
    tile + f32 matmul accumulator (Mosaic-internal scratch)."""
    return 2 * cin * x_itemsize + 2 * cout * out_itemsize + 4 * cin + 4 * cout


def _pick_tile(total, unit, per_unit_bytes, fixed_bytes,
               budget_bytes=_VMEM_BLOCK_BUDGET, preferred=512):
    """Pick a tile (multiple of `unit`) and the padded total.

    The tile is sized so the budgeted VMEM footprint stays under
    `budget_bytes`, capped at `preferred` positions (HBM roofline is ~flat past
    ~512 rows/lanes) and never falls back to an unbounded full-extent block;
    the caller zero-pads `total` up to the returned padded extent."""
    if total <= unit:
        return total, total                       # full extent (always legal)
    budget_units = max(1, (budget_bytes - fixed_bytes) // (per_unit_bytes * unit))
    pref_units = max(1, preferred // unit)
    total_units = pl.cdiv(total, unit)
    tile_units = max(1, min(budget_units, pref_units, total_units))
    # Prefer >= 2 blocks so the grid can shard across both v7x TensorCores.
    if tile_units == total_units and total_units >= 4:
        tile_units = (total_units + 1) // 2
    tile = tile_units * unit
    padded = pl.cdiv(total, tile) * tile
    return tile, padded


# ----------------------------------------------------------------------------
# Kernel 1 (primary): NCHW-native fused channel-LayerNorm + 1x1 conv
# ----------------------------------------------------------------------------
def _prenorm_conv1x1_nchw_kernel(x_ref, w_ref, b_ref, o_ref):
    # x_ref: (1, Cin, TS)   w_ref: (Cout, Cin) with g pre-folded
    # b_ref: (Cout, 1) f32  o_ref: (1, Cout, TS)
    x = x_ref[0].astype(jnp.float32)                      # (Cin, TS)
    mean = jnp.mean(x, axis=0, keepdims=True)             # channel (sublane) reduce
    cen = x - mean
    var = jnp.mean(cen * cen, axis=0, keepdims=True)      # unbiased=False
    xn = cen * jax.lax.rsqrt(var + EPS_F32)
    # Normalized tile feeds the MXU straight from vregs (no HBM round-trip);
    # operands in the weight dtype (bf16 stays bf16), f32 accumulation.
    y = jnp.dot(w_ref[...], xn.astype(w_ref.dtype),
                preferred_element_type=jnp.float32)        # (Cout, TS)
    o_ref[0] = (y + b_ref[...]).astype(o_ref.dtype)


def prenorm_conv1x1_nchw(x_nchw, g_param, w_oc, b_o):
    """Fused PreNorm(LayerNorm) + 1x1 conv, NCHW-native (no layout transposes).
    x: (B, C, H, W); g: (1, C, 1, 1); w_oc: (Cout, Cin) torch Conv2d layout;
    b_o: (Cout,)."""
    B, C, H, W = x_nchw.shape
    Cout = w_oc.shape[0]
    HW = H * W
    x = x_nchw.reshape(B, C, HW)

    # Fold the LayerNorm gain into the conv weight: (xhat*g) @ W == xhat @ (gW).
    g = g_param.reshape(1, C).astype(jnp.float32)
    w = (w_oc.astype(jnp.float32) * g).astype(w_oc.dtype)           # (Cout, Cin)
    b = jnp.asarray(b_o, jnp.float32).reshape(Cout, 1)

    x_item = jnp.dtype(x.dtype).itemsize
    w_item = jnp.dtype(w.dtype).itemsize
    per_lane = _per_position_bytes(C, Cout, x_item, x_item)
    fixed = 2 * C * Cout * w_item + (1 << 20)               # weight (x2 worst-case) + slack
    ts, hw_pad = _pick_tile(HW, 128, per_lane, fixed)        # lane dim: multiple of 128
    if hw_pad != HW:
        # Zero-padded spatial positions normalize to 0 and are sliced off below.
        x = jnp.pad(x, ((0, 0), (0, 0), (0, hw_pad - HW)))

    cost = pl.CostEstimate(
        flops=2 * B * HW * C * Cout + 7 * B * HW * C,
        transcendentals=B * HW,
        bytes_accessed=B * HW * C * x_item + C * Cout * w_item + B * HW * Cout * x_item)

    out = pl.pallas_call(
        _prenorm_conv1x1_nchw_kernel,
        out_shape=jax.ShapeDtypeStruct((B, Cout, hw_pad), x.dtype),
        grid=(B, hw_pad // ts),
        in_specs=[
            pl.BlockSpec((1, C, ts), lambda bi, si: (bi, 0, si)),
            _invariant_spec((Cout, C), lambda bi, si: (0, 0)),
            _invariant_spec((Cout, 1), lambda bi, si: (0, 0)),
        ],
        out_specs=pl.BlockSpec((1, Cout, ts), lambda bi, si: (bi, 0, si)),
        compiler_params=pltpu.CompilerParams(
            dimension_semantics=("parallel", "parallel"),
            vmem_limit_bytes=_VMEM_LIMIT_BYTES),
        cost_estimate=cost,
    )(x, w, b)
    return out[:, :, :HW].reshape(B, Cout, H, W)


# ----------------------------------------------------------------------------
# Kernel 2: channels-last fused LN + 1x1 conv on flattened (B*HW, C) rows
# ----------------------------------------------------------------------------
def _prenorm_conv1x1_rows_kernel(x_ref, w_ref, b_ref, o_ref):
    # x_ref: (TM, Cin)  w_ref: (Cin, Cout) with g pre-folded  b_ref: (1, Cout)
    x = x_ref[...].astype(jnp.float32)
    mean = jnp.mean(x, axis=-1, keepdims=True)
    cen = x - mean
    var = jnp.mean(cen * cen, axis=-1, keepdims=True)      # unbiased=False
    xn = cen * jax.lax.rsqrt(var + EPS_F32)
    y = jnp.dot(xn.astype(w_ref.dtype), w_ref[...],
                preferred_element_type=jnp.float32)         # (TM, Cout)
    o_ref[...] = (y + b_ref[...]).astype(o_ref.dtype)


def prenorm_conv1x1_rows(x_rows, g, w_io, b):
    """Fused LN + 1x1 conv for channels-last callers.
    x_rows: (M, Cin) -- any flattening of (B, H, W); g: (1, Cin);
    w_io: (Cin, Cout); b: (Cout,) or (1, Cout)."""
    M, Cin = x_rows.shape
    Cout = w_io.shape[1]
    g32 = jnp.asarray(g, jnp.float32).reshape(Cin, 1)
    w = (w_io.astype(jnp.float32) * g32).astype(w_io.dtype)         # fold g
    b2 = jnp.asarray(b, jnp.float32).reshape(1, Cout)

    x_item = jnp.dtype(x_rows.dtype).itemsize
    w_item = jnp.dtype(w.dtype).itemsize
    row_unit = 8 * (4 // min(x_item, 4))        # 8 rows f32, 16 bf16, 32 int8
    per_row = _per_position_bytes(Cin, Cout, x_item, x_item)
    fixed = 2 * Cin * Cout * w_item + (1 << 20)
    tm, m_pad = _pick_tile(M, row_unit, per_row, fixed)
    x = x_rows if m_pad == M else jnp.pad(x_rows, ((0, m_pad - M), (0, 0)))

    cost = pl.CostEstimate(
        flops=2 * M * Cin * Cout + 7 * M * Cin,
        transcendentals=M,
        bytes_accessed=M * Cin * x_item + Cin * Cout * w_item + M * Cout * x_item)

    out = pl.pallas_call(
        _prenorm_conv1x1_rows_kernel,
        out_shape=jax.ShapeDtypeStruct((m_pad, Cout), x_rows.dtype),
        grid=(m_pad // tm,),
        in_specs=[
            pl.BlockSpec((tm, Cin), lambda i: (i, 0)),
            _invariant_spec((Cin, Cout), lambda i: (0, 0)),
            _invariant_spec((1, Cout), lambda i: (0, 0)),
        ],
        out_specs=pl.BlockSpec((tm, Cout), lambda i: (i, 0)),
        compiler_params=pltpu.CompilerParams(
            dimension_semantics=("parallel",),
            vmem_limit_bytes=_VMEM_LIMIT_BYTES),
        cost_estimate=cost,
    )(x, w, b2)
    return out[:M]


# ----------------------------------------------------------------------------
# Kernel 3 (generic-fn path): standalone channel-LayerNorm on flattened rows
# ----------------------------------------------------------------------------
def _layernorm_rows_kernel(x_ref, g_ref, o_ref):
    # x_ref: (TM, C)   g_ref: (1, C) f32   o_ref: (TM, C)
    x = x_ref[...].astype(jnp.float32)
    mean = jnp.mean(x, axis=-1, keepdims=True)
    cen = x - mean
    var = jnp.mean(cen * cen, axis=-1, keepdims=True)       # unbiased=False
    o_ref[...] = (cen * jax.lax.rsqrt(var + EPS_F32) * g_ref[...]).astype(o_ref.dtype)


def layernorm_rows(x_rows, g):
    """Channel LayerNorm over the last axis of flattened (M, C) rows."""
    M, C = x_rows.shape
    x_item = jnp.dtype(x_rows.dtype).itemsize
    row_unit = 8 * (4 // min(x_item, 4))
    per_row = 4 * C * x_item + 8 * C            # in/out double-buffers + f32 scratch
    tm, m_pad = _pick_tile(M, row_unit, per_row, fixed_bytes=(1 << 20))
    x = x_rows if m_pad == M else jnp.pad(x_rows, ((0, m_pad - M), (0, 0)))
    out = pl.pallas_call(
        _layernorm_rows_kernel,
        out_shape=jax.ShapeDtypeStruct((m_pad, C), x_rows.dtype),
        grid=(m_pad // tm,),
        in_specs=[
            pl.BlockSpec((tm, C), lambda i: (i, 0)),
            _invariant_spec((1, C), lambda i: (0, 0)),
        ],
        out_specs=pl.BlockSpec((tm, C), lambda i: (i, 0)),
        compiler_params=pltpu.CompilerParams(
            dimension_semantics=("parallel",),
            vmem_limit_bytes=_VMEM_LIMIT_BYTES),
    )(x, jnp.asarray(g, jnp.float32).reshape(1, C))
    return out[:M]


def prenorm_apply_nchw(x_nchw, g_param, fn_rows):
    """Generic PreNorm: arbitrary fn on channels-last (B*H*W, C) rows."""
    # TODO(synk): an arbitrary `fn` cannot be fused in-kernel; callers holding
    # channels-last activations should use layernorm_rows directly -- these
    # transposes exist only to match the NCHW module interface.
    B, C, H, W = x_nchw.shape
    rows = jnp.transpose(x_nchw, (0, 2, 3, 1)).reshape(B * H * W, C)
    y = fn_rows(layernorm_rows(rows, g_param.reshape(1, C)))
    Cout = y.shape[-1]
    return jnp.transpose(y.reshape(B, H, W, Cout), (0, 3, 1, 2))


# ----------------------------------------------------------------------------
# Pure-JAX reference (mirrors the PyTorch semantics, NCHW)
# ----------------------------------------------------------------------------
def _reference(x_nchw, g_param, w_oc, b_o):
    mean = jnp.mean(x_nchw, axis=1, keepdims=True)
    var = jnp.mean((x_nchw - mean) ** 2, axis=1, keepdims=True)   # unbiased=False
    xn = (x_nchw - mean) * jax.lax.rsqrt(var + EPS_F32) * g_param
    return jnp.einsum("bchw,oc->bohw", xn, w_oc) + b_o.reshape(1, -1, 1, 1)


if __name__ == "__main__":
    key = jax.random.PRNGKey(0)
    k_x, k_g, k_w, k_b = jax.random.split(key, 4)

    B, C, H, W = 2, 4, 16, 16
    x = jax.random.normal(k_x, (B, C, H, W), dtype=jnp.float32)

    # Module init has g = ones; perturb it so the g-folding path is exercised.
    g_param = 1.0 + 0.1 * jax.random.normal(k_g, (1, C, 1, 1), dtype=jnp.float32)
    # Demo `fn`: 1x1 conv C -> C (the pointwise conv PreNorm typically wraps).
    w = jax.random.normal(k_w, (C, C), dtype=jnp.float32) * 0.1      # (Cout, Cin)
    b = jax.random.normal(k_b, (C,), dtype=jnp.float32) * 0.1

    ref = _reference(x, g_param, w, b)

    # 1) Primary: NCHW-native fused LN + 1x1 conv (no layout transposes).
    out = jax.block_until_ready(prenorm_conv1x1_nchw(x, g_param, w, b))
    assert out.shape == (B, C, H, W), out.shape
    assert jnp.allclose(out, ref, atol=1e-4, rtol=1e-4), \
        float(jnp.max(jnp.abs(out - ref)))

    # 2) Channels-last fused path on flattened (B*HW, C) rows.
    rows = jnp.transpose(x, (0, 2, 3, 1)).reshape(B * H * W, C)
    y_rows = jax.block_until_ready(
        prenorm_conv1x1_rows(rows, g_param.reshape(1, C), jnp.transpose(w), b))
    out2 = jnp.transpose(y_rows.reshape(B, H, W, C), (0, 3, 1, 2))
    assert jnp.allclose(out2, ref, atol=1e-4, rtol=1e-4), \
        float(jnp.max(jnp.abs(out2 - ref)))

    # 3) Generic-fn path: standalone LN kernel + arbitrary fn in plain JAX.
    out3 = jax.block_until_ready(
        prenorm_apply_nchw(x, g_param,
                           lambda yn: yn @ jnp.transpose(w) + b.reshape(1, C)))
    assert jnp.allclose(out3, ref, atol=1e-4, rtol=1e-4), \
        float(jnp.max(jnp.abs(out3 - ref)))

    print("KERNEL_OK")
</pallas_src>

<mosaic_0001>
module attributes {stable_mosaic.version = 11 : i64} {
  func.func @_prenorm_conv1x1_nchw_kernel(%arg0: i32, %arg1: i32, %arg2: memref<1x4x256xf32, #tpu.memory_space<vmem>>, %arg3: memref<4x4xf32, #tpu.memory_space<vmem>>, %arg4: memref<4x1xf32, #tpu.memory_space<vmem>>, %arg5: memref<1x4x256xf32, #tpu.memory_space<vmem>>) attributes {dimension_semantics = [#tpu.dimension_semantics<parallel>, #tpu.dimension_semantics<parallel>], iteration_bounds = array<i64: 2, 1>, scalar_prefetch = 0 : i64, scratch_operands = 0 : i64, tpu.core_type = #tpu.core_type<tc>, window_params = [{transform_indices = @transform_0, window_bounds = array<i64: 1, 4, 256>}, {pipeline_mode = #tpu.pipeline_mode<synchronous>, transform_indices = @transform_1, window_bounds = array<i64: 4, 4>}, {pipeline_mode = #tpu.pipeline_mode<synchronous>, transform_indices = @transform_2, window_bounds = array<i64: 4, 1>}, {transform_indices = @transform_3, window_bounds = array<i64: 1, 4, 256>}]} {
    %c0 = arith.constant 0 : index
    %c0_0 = arith.constant 0 : index
    %c0_1 = arith.constant 0 : index
    %0 = vector.load %arg2[%c0, %c0_0, %c0_1] : memref<1x4x256xf32, #tpu.memory_space<vmem>>, vector<1x4x256xf32>
    %1 = vector.shape_cast %0 : vector<1x4x256xf32> to vector<4x256xf32>
    %cst = arith.constant dense<0.000000e+00> : vector<256xf32>
    %2 = vector.multi_reduction <add>, %1, %cst [0] : vector<4x256xf32> to vector<256xf32>
    %3 = vector.shape_cast %2 : vector<256xf32> to vector<1x256xf32>
    %cst_2 = arith.constant 4.000000e+00 : f32
    %4 = vector.broadcast %cst_2 : f32 to vector<1x256xf32>
    %5 = arith.divf %3, %4 : vector<1x256xf32>
    %6 = vector.broadcast %5 : vector<1x256xf32> to vector<4x256xf32>
    %7 = arith.subf %1, %6 : vector<4x256xf32>
    %8 = arith.mulf %7, %7 : vector<4x256xf32>
    %cst_3 = arith.constant dense<0.000000e+00> : vector<256xf32>
    %9 = vector.multi_reduction <add>, %8, %cst_3 [0] : vector<4x256xf32> to vector<256xf32>
    %10 = vector.shape_cast %9 : vector<256xf32> to vector<1x256xf32>
    %cst_4 = arith.constant 4.000000e+00 : f32
    %11 = vector.broadcast %cst_4 : f32 to vector<1x256xf32>
    %12 = arith.divf %10, %11 : vector<1x256xf32>
    %cst_5 = arith.constant 9.99999974E-6 : f32
    %13 = vector.broadcast %cst_5 : f32 to vector<1x256xf32>
    %14 = arith.addf %12, %13 : vector<1x256xf32>
    %15 = math.rsqrt %14 : vector<1x256xf32>
    %16 = vector.broadcast %15 : vector<1x256xf32> to vector<4x256xf32>
    %17 = arith.mulf %7, %16 : vector<4x256xf32>
    %c0_6 = arith.constant 0 : index
    %c0_7 = arith.constant 0 : index
    %18 = vector.load %arg3[%c0_6, %c0_7] : memref<4x4xf32, #tpu.memory_space<vmem>>, vector<4x4xf32>
    %cst_8 = arith.constant dense<0.000000e+00> : vector<4x256xf32>
    %19 = tpu.matmul %18, %17, %cst_8 {dimension_numbers = #tpu.dot_dimension_numbers<[1], [0], [0], [1], [0, 0, 1, 1], [], []>} : vector<4x4xf32>, vector<4x256xf32>, vector<4x256xf32> -> vector<4x256xf32>
    %c0_9 = arith.constant 0 : index
    %c0_10 = arith.constant 0 : index
    %20 = vector.load %arg4[%c0_9, %c0_10] : memref<4x1xf32, #tpu.memory_space<vmem>>, vector<4x1xf32>
    %21 = vector.broadcast %20 : vector<4x1xf32> to vector<4x256xf32>
    %22 = arith.addf %19, %21 : vector<4x256xf32>
    %c0_11 = arith.constant 0 : index
    %c0_12 = arith.constant 0 : index
    %c0_13 = arith.constant 0 : index
    %23 = vector.load %arg5[%c0_11, %c0_12, %c0_13] : memref<1x4x256xf32, #tpu.memory_space<vmem>>, vector<1x4x256xf32>
    %24 = vector.shape_cast %23 : vector<1x4x256xf32> to vector<4x256xf32>
    %25 = vector.shape_cast %22 : vector<4x256xf32> to vector<1x4x256xf32>
    tpu.vector_store %arg5[%c0_11, %c0_12, %c0_13], %25 {strides = array<i32>} : memref<1x4x256xf32, #tpu.memory_space<vmem>>, vector<1x4x256xf32>,
    return
  }
  func.func @transform_0(%arg0: i32, %arg1: i32) -> (i32, i32, i32) {
    %c0_i32 = arith.constant 0 : i32
    %c0_i32_0 = arith.constant 0 : i32
    return %arg0, %c0_i32, %arg1 : i32, i32, i32
  }
  func.func @transform_1(%arg0: i32, %arg1: i32) -> (i32, i32) {
    %c0_i32 = arith.constant 0 : i32
    %c0_i32_0 = arith.constant 0 : i32
    %c0_i32_1 = arith.constant 0 : i32
    return %c0_i32, %c0_i32_0 : i32, i32
  }
  func.func @transform_2(%arg0: i32, %arg1: i32) -> (i32, i32) {
    %c0_i32 = arith.constant 0 : i32
    %c0_i32_0 = arith.constant 0 : i32
    %c0_i32_1 = arith.constant 0 : i32
    return %c0_i32, %c0_i32_0 : i32, i32
  }
  func.func @transform_3(%arg0: i32, %arg1: i32) -> (i32, i32, i32) {
    %c0_i32 = arith.constant 0 : i32
    %c0_i32_0 = arith.constant 0 : i32
    return %arg0, %c0_i32, %arg1 : i32, i32, i32
  }
}

</mosaic_0001>

<llo_original>
// kernel: tpu_custom_call.1
$region0: #{tpu_custom_call.1}
  #allocation0 [shape = 'u32[]', space=smem, size = 0x4, offset = 0x4, fixed_abs, tag = 'smem constant byte address 0x4 - core index']
  #allocation1 [shape = 'u32[144,128]{1,0:T(1,128)}', space=vmem, size = 0x12000, scoped, tag = 'internal scratch']
  %s0 = inlined_call_operand.hbm [shape: f32[2,4,256], index: 0, kind: input, shape index: {}]
  %s1 = inlined_call_operand.vmem [shape: f32[4,4], index: 1, kind: input, shape index: {}]
  %s2 = inlined_call_operand.vmem [shape: f32[4,1], index: 2, kind: input, shape index: {}]
  %s3 = inlined_call_operand.hbm [shape: f32[2,4,256], index: 3, kind: output, shape index: {}]
  %s4 = sld [smem:[#allocation0]]
  $region49: #{tpu_custom_call.1} parent=0
    _
  %s6 = ssub.s32 1, %s4
  %s7 = scalar_select 0, %s6, %s4
  $region1: #{tpu_custom_call.1} parent=0
    #allocation2 [shape = 'u8[8192]{0}', space=vmem, size = 0x2000, scoped, tag = 'input window, operand 0']
    #allocation3 [shape = 's32[2]{0}', space=sflag, size = 0x8, scoped, tag = 'scoped memory for tpu_custom_call.1']
    #allocation4 [shape = 's32[2]{0}', space=sflag, size = 0x8, scoped, tag = 'scoped memory for tpu_custom_call.1']
    #allocation5 [shape = 'u8[8192]{0}', space=vmem, size = 0x2000, scoped, tag = 'output window, operand 0']
    %8 = vsyncpa [#allocation3], 0
    %s9 = scalar_lea.sflag [#allocation3], 1
    %10 = vsyncpa %s9, 0
    %11 = vsyncpa [#allocation4], 0
    %s12 = scalar_lea.sflag [#allocation4], 1
    %13 = vsyncpa %s12, 0
    loop: start=0, step=1, limit=4
    $region2: #{tpu_custom_call.1} parent=1 // loop_pre_header
      _
    $region3: #{tpu_custom_call.1} parent=1 // loop_header
      %s15 = sphi 0, %s19
      %p16 = scmp.ge.s32.totalorder %s15, 4
      %s22 = sphi 0, %s34
      %s23 = sphi 0, %s30
      %s24 = sphi 0, %s22
      %s25 = sphi 0, %s23
      %s26 = sphi 0, %s24
      %s27 = sphi 0, %s25
      %s39 = sphi 0, %s41
      %s42 = sphi 0, %s39
      %s43 = sphi 0, %s42
      %s59 = sphi 0, %s43
      %s63 = sphi 0, %s63
      %s65 = sphi 0, %s63
      %s66 = sphi 0, %s65
      %s80 = sphi 0, %s66
      %s84 = sphi 0, %s84
      %s86 = sphi 0, %s84
      %s87 = sphi 0, %s86
      %s101 = sphi 0, %s87
      %s109 = sphi 0, %s111
      %s112 = sphi 0, %s109
      %s113 = sphi 0, %s112
      %s129 = sphi 0, %s113
    $region4: #{tpu_custom_call.1} parent=1 // loop_header_branch
      %18 = sbr.rel (%p16) target = $region8
    $region5: #{tpu_custom_call.1} parent=1 // loop_body
      %s20 = ssub.s32 %s15, 1
      %s21 = ssub.s32 %s15, 2
      %s28 = sadd.s32 1, %s23
      %p29 = scmp.ge.s32.totalorder %s28, 1
      %s30 = scalar_select %p29, 0, %s28
      %s31 = sadd.s32 1, %s22
      %s32 = scalar_select %p29, %s31, %s22
      %p33 = scmp.ge.s32.totalorder %s32, 2
      %s34 = scalar_select %p33, 0, %s32
      %s35 = ssub.s32 %s22, %s34
      %s36 = ssub.s32 %s23, %s30
      %s37 = sor.u32 %s35, %s36
      %p38 = scmp.eq.s32.totalorder %s37, 0
      %s40 = sadd.s32 %s39, 1
      %s41 = scalar_select %p38, %s39, %s40
      %p44 = pneg %p38
      %p45 = scmp.eq.s32.totalorder %s15, 1
      %p46 = por %p44, %p45
      %p47 = scmp.ne.s32.totalorder %s39, %s42
      %p48 = scmp.eq.s32.totalorder %s15, 0
      %p49 = por %p47, %p48
      %p50 = scmp.ne.s32.totalorder %s39, %s42
      %p51 = scmp.eq.s32.totalorder %s20, 1
      %p52 = por %p50, %p51
      %p53 = scmp.ne.s32.totalorder %s42, %s43
      %p54 = scmp.eq.s32.totalorder %s20, 0
      %p55 = por %p53, %p54
      %p56 = scmp.ne.s32.totalorder %s42, %s43
      %p57 = scmp.eq.s32.totalorder %s21, 1
      %p58 = por %p56, %p57
      %p60 = scmp.ne.s32.totalorder %s43, %s59
      %p61 = scmp.eq.s32.totalorder %s21, 0
      %p62 = por %p60, %p61
      %s64 = sadd.s32 %s63, 1
      %p67 = scmp.eq.s32.totalorder %s15, 1
      %p68 = scmp.ne.s32.totalorder %s63, %s65
      %p69 = scmp.eq.s32.totalorder %s15, 0
      %p70 = por %p68, %p69
      %p71 = scmp.ne.s32.totalorder %s63, %s65
      %p72 = scmp.eq.s32.totalorder %s20, 1
      %p73 = por %p71, %p72
      %p74 = scmp.ne.s32.totalorder %s65, %s66
      %p75 = scmp.eq.s32.totalorder %s20, 0
      %p76 = por %p74, %p75
      %p77 = scmp.ne.s32.totalorder %s65, %s66
      %p78 = scmp.eq.s32.totalorder %s21, 1
      %p79 = por %p77, %p78
      %p81 = scmp.ne.s32.totalorder %s66, %s80
      %p82 = scmp.eq.s32.totalorder %s21, 0
      %p83 = por %p81, %p82
      %s85 = sadd.s32 %s84, 1
      %p88 = scmp.eq.s32.totalorder %s15, 1
      %p89 = scmp.ne.s32.totalorder %s84, %s86
      %p90 = scmp.eq.s32.totalorder %s15, 0
      %p91 = por %p89, %p90
      %p92 = scmp.ne.s32.totalorder %s84, %s86
      %p93 = scmp.eq.s32.totalorder %s20, 1
      %p94 = por %p92, %p93
      %p95 = scmp.ne.s32.totalorder %s86, %s87
      %p96 = scmp.eq.s32.totalorder %s20, 0
      %p97 = por %p95, %p96
      %p98 = scmp.ne.s32.totalorder %s86, %s87
      %p99 = scmp.eq.s32.totalorder %s21, 1
      %p100 = por %p98, %p99
      %p102 = scmp.ne.s32.totalorder %s87, %s101
      %p103 = scmp.eq.s32.totalorder %s21, 0
      %p104 = por %p102, %p103
      %s105 = ssub.s32 %s22, %s34
      %s106 = ssub.s32 %s23, %s30
      %s107 = sor.u32 %s105, %s106
      %p108 = scmp.eq.s32.totalorder %s107, 0
      %s110 = sadd.s32 %s109, 1
      %s111 = scalar_select %p108, %s109, %s110
      %p114 = pneg %p108
      %p115 = scmp.eq.s32.totalorder %s15, 1
      %p116 = por %p114, %p115
      %p117 = scmp.ne.s32.totalorder %s109, %s112
      %p118 = scmp.eq.s32.totalorder %s15, 0
      %p119 = por %p117, %p118
      %p120 = scmp.ne.s32.totalorder %s109, %s112
      %p121 = scmp.eq.s32.totalorder %s20, 1
      %p122 = por %p120, %p121
      %p123 = scmp.ne.s32.totalorder %s112, %s113
      %p124 = scmp.eq.s32.totalorder %s20, 0
      %p125 = por %p123, %p124
      %p126 = scmp.ne.s32.totalorder %s112, %s113
      %p127 = scmp.eq.s32.totalorder %s21, 1
      %p128 = por %p126, %p127
      %p130 = scmp.ne.s32.totalorder %s113, %s129
      %p131 = scmp.eq.s32.totalorder %s21, 0
      %p132 = por %p130, %p131
      %p133 = scmp.le.s32.totalorder 1, %s15
      %p134 = scmp.lt.s32.totalorder %s15, 3
      %p135 = pnand %p133, %p134
      %p136 = pneg %p135
      // Predicated region
      $region9: #{tpu_custom_call.1} parent=5 // pred_check
        _
      $region10: #{tpu_custom_call.1} parent=5 // pred_check_branch
        %138 = sbr.rel (%p135) target = $region12
      $region11: #{tpu_custom_call.1} parent=5 // pred_region
        %s139 = ssub.s32 %s15, 1
        // Predicated region
        $region13: #{tpu_custom_call.1} parent=11 // pred_check
          %p140 = pneg %p76
        $region14: #{tpu_custom_call.1} parent=11 // pred_check_branch
          %142 = sbr.rel (%p140) target = $region16
        $region15: #{tpu_custom_call.1} parent=11 // pred_region
          _
        $region16: #{tpu_custom_call.1} parent=11 // pred_fallthru
          _
        // Predicated region
        $region17: #{tpu_custom_call.1} parent=11 // pred_check
          %p143 = pneg %p97
        $region18: #{tpu_custom_call.1} parent=11 // pred_check_branch
          %145 = sbr.rel (%p143) target = $region20
        $region19: #{tpu_custom_call.1} parent=11 // pred_region
          _
        $region20: #{tpu_custom_call.1} parent=11 // pred_fallthru
          _
      $region12: #{tpu_custom_call.1} parent=5 // pred_fallthru
        _
      %p146 = scmp.lt.s32.totalorder %s15, 2
      // Predicated region
      $region21: #{tpu_custom_call.1} parent=5 // pred_check
        %p147 = pneg %p146
      $region22: #{tpu_custom_call.1} parent=5 // pred_check_branch
        %149 = sbr.rel (%p147) target = $region24
      $region23: #{tpu_custom_call.1} parent=5 // pred_region
        // Predicated region
        $region25: #{tpu_custom_call.1} parent=23 // pred_check
          %p150 = pneg %p49
        $region26: #{tpu_custom_call.1} parent=23 // pred_check_branch
          %152 = sbr.rel (%p150) target = $region28
        $region27: #{tpu_custom_call.1} parent=23 // pred_region
          %s153 = sand.u32 %s39, 1
          %s154 = scalar_lea.sflag [#allocation3], %s153
          %s155 = sand.u32 %s39, 1
          %s156 = smul.addr %s155, 8
          %s157 = scalar_lea.vmem [#allocation2], %s156
          %s158 = smul.u32 2, %s23
          %s160 = ssub.s32 128, 128
          %161 = vsyncadd %s154, %s160
          %s162 = smul.addr %s22, 2
          %s163 = sadd.s32 %s158, %s162
          %s164 = smul.addr %s163, 64
          %s165 = scalar_lea.hbm %s0, %s164
          %s167 = sshll.u32 %s157, 4
          %s168 = int_to_ptr.vmem [resolvable:$true] %s167
          %170 = dma.hbm_to_vmem [thread:$0]  %s165, 128, %s168, %s154
        $region28: #{tpu_custom_call.1} parent=23 // pred_fallthru
          _
      $region24: #{tpu_custom_call.1} parent=5 // pred_fallthru
        _
      %p171 = scmp.le.s32.totalorder 1, %s15
      %p172 = scmp.lt.s32.totalorder %s15, 3
      %p173 = pnand %p171, %p172
      %p174 = pneg %p173
      // Predicated region
      $region29: #{tpu_custom_call.1} parent=5 // pred_check
        _
      $region30: #{tpu_custom_call.1} parent=5 // pred_check_branch
        %176 = sbr.rel (%p173) target = $region32
      $region31: #{tpu_custom_call.1} parent=5 // pred_region
        %s177 = ssub.s32 %s15, 1
        %s178 = sand.u32 %s42, 1
        %s179 = scalar_lea.sflag [#allocation3], %s178
        %s180 = sand.u32 %s42, 1
        %s181 = smul.addr %s180, 8
        %s182 = scalar_lea.vmem [#allocation2], %s181
        // Predicated region
        $region33: #{tpu_custom_call.1} parent=31 // pred_check
          %p183 = pneg %p55
        $region34: #{tpu_custom_call.1} parent=31 // pred_check_branch
          %185 = sbr.rel (%p183) target = $region36
        $region35: #{tpu_custom_call.1} parent=31 // pred_region
          %186 = dma.done %s179, 128
        $region36: #{tpu_custom_call.1} parent=31 // pred_fallthru
          _
        %s187 = sand.u32 %s42, 1
        %s188 = scalar_lea.sflag [#allocation3], %s187
        %s189 = sand.u32 %s42, 1
        %s190 = smul.addr %s189, 8
        %s191 = scalar_lea.vmem [#allocation2], %s190
        %p192 = pneg %p55
        %p193 = pneg %p52
        %p194 = pneg %p76
        %p195 = pneg %p73
        %p196 = pneg %p97
        %p197 = pneg %p94
        %p198 = pneg %p125
        %p199 = pneg %p122
        %s200 = sand.u32 %s112, 1
        %s201 = scalar_lea.sflag [#allocation4], %s200
        %s202 = sand.u32 %s112, 1
        %s203 = smul.addr %s202, 8
        %s204 = scalar_lea.vmem [#allocation5], %s203
        %s205 = smul.u32 2, %s25
        %s206 = smul.u32 2, %s25
        %v207 = vld [vmem:[%s182] sm:$0xff]
        %v209 = vcombine.high %v207, %v207
        %vm211 = vcmask 1043456
        %v212 = vsel %vm211, %v207, 0.0
        %v213 = vrot.slane %v212, 4
        %v214 = vadd.f32 %v212, %v213
        %v215 = vrot.slane %v214, 2
        %v216 = vadd.f32 %v214, %v215
        %v217 = vrot.slane %v216, 1
        %v218 = vadd.f32 %v216, %v217
        %v219 = vsel %vm211, %v209, 0.0
        %v220 = vrot.slane %v219, 4
        %v221 = vadd.f32 %v219, %v220
        %v222 = vrot.slane %v221, 2
        %v223 = vadd.f32 %v221, %v222
        %v224 = vrot.slane %v223, 1
        %v225 = vadd.f32 %v223, %v224
        %v226 = vrcp.pop 4.0
        %v227 = vmul.f32 %v218, %v226
        %v228 = vmul.f32 %v225, %v226
        %v231 = vcombine.low %v227, %v228
        %v233 = vsub.f32 %v207, %v231
        %v234 = vmul.f32 %v233, %v233
        %v236 = vcombine.high %v234, %v234
        %v238 = vsel %vm211, %v234, 0.0
        %v239 = vrot.slane %v238, 4
        %v240 = vadd.f32 %v238, %v239
        %v241 = vrot.slane %v240, 2
        %v242 = vadd.f32 %v240, %v241
        %v243 = vrot.slane %v242, 1
        %v244 = vadd.f32 %v242, %v243
        %v245 = vsel %vm211, %v236, 0.0
        %v246 = vrot.slane %v245, 4
        %v247 = vadd.f32 %v245, %v246
        %v248 = vrot.slane %v247, 2
        %v249 = vadd.f32 %v247, %v248
        %v250 = vrot.slane %v249, 1
        %v251 = vadd.f32 %v249, %v250
        %v252 = vmul.f32 %v244, %v226
        %v253 = vmul.f32 %v251, %v226
        %v254 = vadd.f32 %v252, 1e-05
        %v255 = vadd.f32 %v253, 1e-05
        %v256 = vrsqrt.pop %v254
        %v257 = vrsqrt.pop %v255
        %v260 = vcombine.low %v256, %v257
        %v262 = vmul.f32 %v233, %v260
        %v263 = vld [vmem:[%s1] sm:$0xf]
        %v264 = vld [vmem:[%s2] sm:$0xf]
        %266 = vset.pattern.permute.xlu0 0
        %267 = vperm.xlu0 %266, %v264
        %v268 = vpop.permute.xlu0 %267
        %v271 = vcombine.high %v262, %v262
        %vm272 = vcmask 31744
        %v274 = vsel %vm272, %v263, 0
        %v276 = vsel %vm211, %v262, 0
        %v278 = vsel %vm211, %v271, 0
        %280 = vmatprep.subr.mxu0 %v278
        %281 = vmatpush1.msra.mxu0 %v276
        %282 = vmatprep.subr.mxu0 0.0
        %283 = vmatpush1.msra.mxu0 0.0
        %284 = vmatprep.subr.mxu0 0.0
        %285 = vmatpush1.msra.mxu0 0.0
        %286 = vmatprep.subr.mxu0 0.0
        %287 = vmatpush1.msra.mxu0 0.0
        %288 = vmatprep.subr.mxu0 0.0
        %289 = vmatpush1.msra.mxu0 0.0
        %290 = vmatprep.subr.mxu0 0.0
        %291 = vmatpush1.msra.mxu0 0.0
        %292 = vmatprep.subr.mxu0 0.0
        %293 = vmatpush1.msra.mxu0 0.0
        %294 = vmatprep.subr.mxu0 0.0
        %295 = vmatpush1.msra.mxu0 0.0
        %296 = vmatprep.subr.mxu0 0.0
        %297 = vmatpush1.msra.mxu0 0.0
        %298 = vmatprep.subr.mxu0 0.0
        %299 = vmatpush1.msra.mxu0 0.0
        %300 = vmatprep.subr.mxu0 0.0
        %301 = vmatpush1.msra.mxu0 0.0
        %302 = vmatprep.subr.mxu0 0.0
        %303 = vmatpush1.msra.mxu0 0.0
        %304 = vmatprep.subr.mxu0 0.0
        %305 = vmatpush1.msra.mxu0 0.0
        %306 = vmatprep.subr.mxu0 0.0
        %307 = vmatpush1.msra.mxu0 0.0
        %308 = vmatprep.subr.mxu0 0.0
        %309 = vmatpush1.msra.mxu0 0.0
        %310 = vmatprep.subr.mxu0 0.0
        %311 = vmatpush1.msra.mxu0 0.0
        %312 = vmatprep.subr.mxu0 0.0
        %313 = vmatpush1.msra.mxu0 0.0
        %314 = vmatprep.subr.mxu0 0.0
        %315 = vmatpush1.msra.mxu0 0.0
        %316 = vmatprep.subr.mxu0 0.0
        %317 = vmatpush1.msra.mxu0 0.0
        %318 = vmatprep.subr.mxu0 0.0
        %319 = vmatpush1.msra.mxu0 0.0
        %320 = vmatprep.subr.mxu0 0.0
        %321 = vmatpush1.msra.mxu0 0.0
        %322 = vmatprep.subr.mxu0 0.0
        %323 = vmatpush1.msra.mxu0 0.0
        %324 = vmatprep.subr.mxu0 0.0
        %325 = vmatpush1.msra.mxu0 0.0
        %326 = vmatprep.subr.mxu0 0.0
        %327 = vmatpush1.msra.mxu0 0.0
        %328 = vmatprep.subr.mxu0 0.0
        %329 = vmatpush1.msra.mxu0 0.0
        %330 = vmatprep.subr.mxu0 0.0
        %331 = vmatpush1.msra.mxu0 0.0
        %332 = vmatprep.subr.mxu0 0.0
        %333 = vmatpush1.msra.mxu0 0.0
        %334 = vmatprep.subr.mxu0 0.0
        %335 = vmatpush1.msra.mxu0 0.0
        %336 = vmatprep.subr.mxu0 0.0
        %337 = vmatpush1.msra.mxu0 0.0
        %338 = vmatprep.subr.mxu0 0.0
        %339 = vmatpush1.msra.mxu0 0.0
        %340 = vmatprep.subr.mxu0 0.0
        %341 = vmatpush1.msra.mxu0 0.0
        %342 = vmatprep.subr.mxu0 0.0
        %343 = vmatpush1.msra.mxu0 0.0
        %344 = vmatprep.mubr.f32.mxu0 0.0
        %345 = vmatmul.mubr.f32.gmra.mrb[0].mxu0 %v274
        %v346 = vpop.f32.mrb[0].mxu0
        %v347 = vadd.f32 %v268, %v346
        %v348 = vpop.f32.mrb[0].mxu0
        %v349 = vadd.f32 %v268, %v348
        %350 = vdwg.mxu0
        %v353 = vcombine.low %v347, %v349
        %355 = vst [vmem:[%s204] sm:$0xff] %v353
        %s356 = sand.u32 %s112, 1
        %s357 = scalar_lea.sflag [#allocation4], %s356
        %s358 = sand.u32 %s112, 1
        %s359 = smul.addr %s358, 8
        %s360 = scalar_lea.vmem [#allocation5], %s359
        // Predicated region
        $region37: #{tpu_custom_call.1} parent=31 // pred_check
          %p361 = pneg %p122
        $region38: #{tpu_custom_call.1} parent=31 // pred_check_branch
          %363 = sbr.rel (%p361) target = $region40
        $region39: #{tpu_custom_call.1} parent=31 // pred_region
          %s364 = smul.u32 2, %s25
          %s366 = ssub.s32 128, 128
          %367 = vsyncadd %s357, %s366
          %s368 = smul.addr %s24, 2
          %s369 = sadd.s32 %s364, %s368
          %s370 = smul.addr %s369, 64
          %s371 = scalar_lea.hbm %s3, %s370
          %s373 = sshll.u32 %s360, 4
          %s374 = int_to_ptr.vmem [resolvable:$true] %s373
          %376 = dma.vmem_to_hbm [thread:$0]  %s374, 128, %s371, %s357
        $region40: #{tpu_custom_call.1} parent=31 // pred_fallthru
          _
      $region32: #{tpu_custom_call.1} parent=5 // pred_fallthru
        _
      %p377 = scmp.le.s32.totalorder 2, %s15
      // Predicated region
      $region41: #{tpu_custom_call.1} parent=5 // pred_check
        %p378 = pneg %p377
      $region42: #{tpu_custom_call.1} parent=5 // pred_check_branch
        %380 = sbr.rel (%p378) target = $region44
      $region43: #{tpu_custom_call.1} parent=5 // pred_region
        %s381 = ssub.s32 %s15, 2
        // Predicated region
        $region45: #{tpu_custom_call.1} parent=43 // pred_check
          %p382 = pneg %p128
        $region46: #{tpu_custom_call.1} parent=43 // pred_check_branch
          %384 = sbr.rel (%p382) target = $region48
        $region47: #{tpu_custom_call.1} parent=43 // pred_region
          %s385 = sand.u32 %s113, 1
          %s386 = scalar_lea.sflag [#allocation4], %s385
          %s387 = sand.u32 %s113, 1
          %s388 = smul.addr %s387, 8
          %s389 = scalar_lea.vmem [#allocation5], %s388
          %390 = dma.done %s386, 128
        $region48: #{tpu_custom_call.1} parent=43 // pred_fallthru
          _
      $region44: #{tpu_custom_call.1} parent=5 // pred_fallthru
        _
    $region6: #{tpu_custom_call.1} parent=1 // loop_footer
      %s19 = sadd.s32 1, %s15
    $region7: #{tpu_custom_call.1} parent=1 // loop_footer_branch
      %14 = sbr.rel target = $region3
    $region8: #{tpu_custom_call.1} parent=1 // loop_exit
      _
    %391 = vsyncpa [#allocation3], 1
    %s392 = scalar_lea.sflag [#allocation3], 1
    %393 = vsyncpa %s392, 1
    %394 = vsyncpa [#allocation4], 1
    %s395 = scalar_lea.sflag [#allocation4], 1
    %396 = vsyncpa %s395, 1

</llo_original>
